<compile_context>
chip_gen: v5e
topology: v5e:2x2
jax: 0.10.0
libtpu: 0.0.40
codegen_flags: <defaults>
</compile_context>

<pallas_src>
import functools

import jax
import jax.numpy as jnp
from jax import lax
from jax.experimental import pallas as pl
from jax.experimental.pallas import tpu as pltpu

LEAKY_SLOPE = 0.01   # nn.LeakyReLU() default
BN_EPS = 1e-5        # nn.BatchNorm2d default


def _im2col_3x3(a, H, W):
    """a: (C, H*W) activation, spatial flattened on the lane axis.
    Returns (9*C, H*W); row block k = (ky*3+kx) holds the input shifted by
    (ky-1, kx-1) with zero padding (== 3x3 conv, padding=1)."""
    C, S = a.shape
    col = lax.broadcasted_iota(jnp.int32, (1, S), 1) % W
    mask_l = (col >= 1).astype(a.dtype)          # valid when reading column w-1
    mask_r = (col <= (W - 2)).astype(a.dtype)    # valid when reading column w+1
    pieces = []
    for dy in (-1, 0, 1):
        for dx in (-1, 0, 1):
            delta = dy * W + dx
            if delta > 0:
                shifted = jnp.concatenate(
                    [a[:, delta:], jnp.zeros((C, delta), a.dtype)], axis=1)
            elif delta < 0:
                shifted = jnp.concatenate(
                    [jnp.zeros((C, -delta), a.dtype), a[:, :S + delta]], axis=1)
            else:
                shifted = a
            if dx == 1:
                shifted = shifted * mask_r
            elif dx == -1:
                shifted = shifted * mask_l
            pieces.append(shifted)
    return jnp.concatenate(pieces, axis=0)


def up_block_kernel(x1_ref, x2_ref, w1x1_ref, b1x1_ref, ut_ref,
                    wc1_ref, s1_ref, sh1_ref, wc2_ref, s2_ref, sh2_ref,
                    o_ref, *, H, W):
    # x1_ref : (1, C1, S1)   low-res skip input (flattened spatial on lanes)
    # x2_ref : (1, C2, S2)   high-res skip input
    # w1x1   : (C2, C1), b1x1: (C2, 1)          1x1 conv
    # ut     : (S1, S2)                         bilinear(align_corners) upsample matrix^T
    # wc1/wc2: (Cout, 9*Cin) im2col-ordered 3x3 conv weights
    # s*/sh* : (Cout, 1)     folded conv-bias + eval-BatchNorm scale / shift
    # o_ref  : (1, Cout, S2)

    # ---- conv1x1 on x1 ----
    x1c = jnp.dot(w1x1_ref[...], x1_ref[0],
                  preferred_element_type=jnp.float32) + b1x1_ref[...]      # (C2, S1)

    # ---- bilinear upsample x2 (scale 2, align_corners=True) as one matmul ----
    x1u = jnp.dot(x1c, ut_ref[...], preferred_element_type=jnp.float32)    # (C2, S2)

    # ---- channel concat [x2, up(x1)] (torch.cat dim=1 order) ----
    xcat = jnp.concatenate([x2_ref[0], x1u], axis=0)                       # (2*C2, S2)

    # ---- ConvBlock: conv3x3 + BN + LeakyReLU + Dropout(id) ----
    col1 = _im2col_3x3(xcat, H, W)                                         # (9*2*C2, S2)
    y1 = jnp.dot(wc1_ref[...], col1, preferred_element_type=jnp.float32)   # (Cout, S2)
    y1 = y1 * s1_ref[...] + sh1_ref[...]
    y1 = jnp.where(y1 > 0, y1, LEAKY_SLOPE * y1)
    # TODO(synk): training-mode Dropout (random mask) / batch-statistics BatchNorm not implemented.

    # ---- conv3x3 + BN + LeakyReLU ----
    col2 = _im2col_3x3(y1, H, W)                                           # (9*Cout, S2)
    y2 = jnp.dot(wc2_ref[...], col2, preferred_element_type=jnp.float32)
    y2 = y2 * s2_ref[...] + sh2_ref[...]
    y2 = jnp.where(y2 > 0, y2, LEAKY_SLOPE * y2)

    o_ref[0] = y2.astype(o_ref.dtype)                                      # single lane-dense store


def _interp_matrix(n_in, n_out):
    """1-D linear interpolation matrix (n_out, n_in), align_corners=True."""
    assert n_in >= 2 and n_out >= 2
    src = jnp.arange(n_out, dtype=jnp.float32) * (n_in - 1) / (n_out - 1)
    i0 = jnp.clip(jnp.floor(src).astype(jnp.int32), 0, n_in - 2)
    frac = src - i0.astype(jnp.float32)
    rows = jnp.arange(n_out)
    m = jnp.zeros((n_out, n_in), jnp.float32)
    m = m.at[rows, i0].add(1.0 - frac)
    m = m.at[rows, i0 + 1].add(frac)
    return m


def up_block(x1_nchw, x2_nchw, w1x1, b1x1, wconv1, s1, sh1, wconv2, s2, sh2):
    """UpBlock forward (bilinear=True, eval-mode BN, identity Dropout). Returns NCHW."""
    N, C1, H1, W1 = x1_nchw.shape
    N2, C2, H2, W2 = x2_nchw.shape
    assert N == N2 and H2 == 2 * H1 and W2 == 2 * W1
    Cout, Cmid = wconv1.shape[0], wconv1.shape[1]          # Cmid == 2*C2
    S1, S2 = H1 * W1, H2 * W2

    x1f = x1_nchw.reshape(N, C1, S1).astype(jnp.float32)
    x2f = x2_nchw.reshape(N, C2, S2).astype(jnp.float32)

    # upsample operator: up_flat = x_flat @ kron(Uh, Uw)^T
    ut = jnp.kron(_interp_matrix(H1, H2), _interp_matrix(W1, W2)).T        # (S1, S2)

    # kernel-friendly weight layouts
    w1x1_2d = w1x1.reshape(C2, C1).astype(jnp.float32)
    b1x1_2d = b1x1.reshape(C2, 1).astype(jnp.float32)
    wc1_2d = jnp.transpose(wconv1, (0, 2, 3, 1)).reshape(Cout, 9 * Cmid)   # [(ky,kx),cin]
    wc2_2d = jnp.transpose(wconv2, (0, 2, 3, 1)).reshape(Cout, 9 * Cout)
    s1_2d, sh1_2d = s1.reshape(Cout, 1), sh1.reshape(Cout, 1)
    s2_2d, sh2_2d = s2.reshape(Cout, 1), sh2.reshape(Cout, 1)

    grid_spec = pltpu.PrefetchScalarGridSpec(
        num_scalar_prefetch=0,
        grid=(N,),
        in_specs=[
            pl.BlockSpec((1, C1, S1), lambda n: (n, 0, 0)),
            pl.BlockSpec((1, C2, S2), lambda n: (n, 0, 0)),
            pl.BlockSpec((C2, C1), lambda n: (0, 0)),
            pl.BlockSpec((C2, 1), lambda n: (0, 0)),
            pl.BlockSpec((S1, S2), lambda n: (0, 0)),
            pl.BlockSpec((Cout, 9 * Cmid), lambda n: (0, 0)),
            pl.BlockSpec((Cout, 1), lambda n: (0, 0)),
            pl.BlockSpec((Cout, 1), lambda n: (0, 0)),
            pl.BlockSpec((Cout, 9 * Cout), lambda n: (0, 0)),
            pl.BlockSpec((Cout, 1), lambda n: (0, 0)),
            pl.BlockSpec((Cout, 1), lambda n: (0, 0)),
        ],
        out_specs=pl.BlockSpec((1, Cout, S2), lambda n: (n, 0, 0)),
    )
    kernel = functools.partial(up_block_kernel, H=H2, W=W2)
    out = pl.pallas_call(
        kernel,
        out_shape=jax.ShapeDtypeStruct((N, Cout, S2), jnp.float32),
        grid_spec=grid_spec,
        compiler_params=pltpu.CompilerParams(
            dimension_semantics=("parallel",)),   # batch axis parallel (2 TCs on v7x)
    )(x1f, x2f, w1x1_2d, b1x1_2d, ut, wc1_2d, s1_2d, sh1_2d, wc2_2d, s2_2d, sh2_2d)
    return out.reshape(N, Cout, H2, W2)


# ------------------------- pure-JAX reference (independent formulation) -------------------------
def _leaky(v):
    return jnp.where(v > 0, v, LEAKY_SLOPE * v)


def _bn_eval(v, g, b, m, var):
    return (v - m[None, :, None, None]) / jnp.sqrt(var[None, :, None, None] + BN_EPS) \
        * g[None, :, None, None] + b[None, :, None, None]


def _upsample_bilinear_ac(x, scale=2):
    N, C, H, W = x.shape
    Ho, Wo = H * scale, W * scale
    hs = jnp.arange(Ho, dtype=jnp.float32) * (H - 1) / (Ho - 1)
    ws = jnp.arange(Wo, dtype=jnp.float32) * (W - 1) / (Wo - 1)
    h0 = jnp.clip(jnp.floor(hs).astype(jnp.int32), 0, H - 2)
    w0 = jnp.clip(jnp.floor(ws).astype(jnp.int32), 0, W - 2)
    fh = (hs - h0.astype(jnp.float32))[None, None, :, None]
    fw = (ws - w0.astype(jnp.float32))[None, None, None, :]
    rows = x[:, :, h0, :] * (1.0 - fh) + x[:, :, h0 + 1, :] * fh
    return rows[:, :, :, w0] * (1.0 - fw) + rows[:, :, :, w0 + 1] * fw


if __name__ == "__main__":
    key = jax.random.PRNGKey(0)
    N, C1, C2, Cout = 2, 8, 4, 8          # in_channels1, in_channels2, out_channels
    H1 = W1 = 8
    H2 = W2 = 16
    ks = jax.random.split(key, 16)

    x1 = jax.random.normal(ks[0], (N, C1, H1, W1), jnp.float32)
    x2 = jax.random.normal(ks[1], (N, C2, H2, W2), jnp.float32)

    # ---- synthetic parameters (shapes from UpBlock.__init__, bilinear=True) ----
    w1x1 = jax.random.normal(ks[2], (C2, C1, 1, 1), jnp.float32) * 0.3     # conv1x1 weight
    b1x1 = jax.random.normal(ks[3], (C2,), jnp.float32) * 0.1              # conv1x1 bias
    Cmid = 2 * C2
    wconv1 = jax.random.normal(ks[4], (Cout, Cmid, 3, 3), jnp.float32) * 0.2
    cb1 = jax.random.normal(ks[5], (Cout,), jnp.float32) * 0.1
    g1 = 1.0 + 0.1 * jax.random.normal(ks[6], (Cout,), jnp.float32)
    be1 = 0.1 * jax.random.normal(ks[7], (Cout,), jnp.float32)
    rm1 = 0.1 * jax.random.normal(ks[8], (Cout,), jnp.float32)
    rv1 = jax.random.uniform(ks[9], (Cout,), jnp.float32, minval=0.5, maxval=1.5)
    wconv2 = jax.random.normal(ks[10], (Cout, Cout, 3, 3), jnp.float32) * 0.2
    cb2 = jax.random.normal(ks[11], (Cout,), jnp.float32) * 0.1
    g2 = 1.0 + 0.1 * jax.random.normal(ks[12], (Cout,), jnp.float32)
    be2 = 0.1 * jax.random.normal(ks[13], (Cout,), jnp.float32)
    rm2 = 0.1 * jax.random.normal(ks[14], (Cout,), jnp.float32)
    rv2 = jax.random.uniform(ks[15], (Cout,), jnp.float32, minval=0.6, maxval=1.4)

    # fold conv bias + eval-mode BatchNorm into per-channel scale/shift
    s1 = g1 / jnp.sqrt(rv1 + BN_EPS)
    sh1 = be1 + (cb1 - rm1) * s1
    s2 = g2 / jnp.sqrt(rv2 + BN_EPS)
    sh2 = be2 + (cb2 - rm2) * s2

    # ---- Pallas kernel ----
    out = up_block(x1, x2, w1x1, b1x1, wconv1, s1, sh1, wconv2, s2, sh2)
    out = jax.block_until_ready(out)

    # ---- reference: conv1x1 -> bilinear upsample -> concat -> ConvBlock (eval) ----
    dn = ("NCHW", "OIHW", "NCHW")
    hp = lax.Precision.HIGHEST
    y = lax.conv_general_dilated(x1, w1x1, (1, 1), "VALID", dimension_numbers=dn,
                                 precision=hp) + b1x1[None, :, None, None]
    yu = _upsample_bilinear_ac(y, 2)
    xc = jnp.concatenate([x2, yu], axis=1)
    c1 = lax.conv_general_dilated(xc, wconv1, (1, 1), "SAME", dimension_numbers=dn,
                                  precision=hp) + cb1[None, :, None, None]
    a1 = _leaky(_bn_eval(c1, g1, be1, rm1, rv1))
    c2 = lax.conv_general_dilated(a1, wconv2, (1, 1), "SAME", dimension_numbers=dn,
                                  precision=hp) + cb2[None, :, None, None]
    ref = _leaky(_bn_eval(c2, g2, be2, rm2, rv2))

    assert out.shape == ref.shape == (N, Cout, H2, W2)
    max_err = float(jnp.max(jnp.abs(out - ref)))
    assert bool(jnp.allclose(out, ref, atol=1e-3, rtol=1e-3)), max_err
    print("KERNEL_OK")
</pallas_src>

<mosaic_0001>
module attributes {stable_mosaic.version = 11 : i64} {
  func.func @up_block_kernel(%arg0: i32, %arg1: memref<1x8x64xf32, #tpu.memory_space<vmem>>, %arg2: memref<1x4x256xf32, #tpu.memory_space<vmem>>, %arg3: memref<4x8xf32, #tpu.memory_space<vmem>>, %arg4: memref<4x1xf32, #tpu.memory_space<vmem>>, %arg5: memref<64x256xf32, #tpu.memory_space<vmem>>, %arg6: memref<8x72xf32, #tpu.memory_space<vmem>>, %arg7: memref<8x1xf32, #tpu.memory_space<vmem>>, %arg8: memref<8x1xf32, #tpu.memory_space<vmem>>, %arg9: memref<8x72xf32, #tpu.memory_space<vmem>>, %arg10: memref<8x1xf32, #tpu.memory_space<vmem>>, %arg11: memref<8x1xf32, #tpu.memory_space<vmem>>, %arg12: memref<1x8x256xf32, #tpu.memory_space<vmem>>) attributes {dimension_semantics = [#tpu.dimension_semantics<parallel>], iteration_bounds = array<i64: 2>, scalar_prefetch = 0 : i64, scratch_operands = 0 : i64, tpu.core_type = #tpu.core_type<tc>, window_params = [{transform_indices = @transform_0, window_bounds = array<i64: 1, 8, 64>}, {transform_indices = @transform_1, window_bounds = array<i64: 1, 4, 256>}, {pipeline_mode = #tpu.pipeline_mode<synchronous>, transform_indices = @transform_2, window_bounds = array<i64: 4, 8>}, {pipeline_mode = #tpu.pipeline_mode<synchronous>, transform_indices = @transform_3, window_bounds = array<i64: 4, 1>}, {pipeline_mode = #tpu.pipeline_mode<synchronous>, transform_indices = @transform_4, window_bounds = array<i64: 64, 256>}, {pipeline_mode = #tpu.pipeline_mode<synchronous>, transform_indices = @transform_5, window_bounds = array<i64: 8, 72>}, {pipeline_mode = #tpu.pipeline_mode<synchronous>, transform_indices = @transform_6, window_bounds = array<i64: 8, 1>}, {pipeline_mode = #tpu.pipeline_mode<synchronous>, transform_indices = @transform_7, window_bounds = array<i64: 8, 1>}, {pipeline_mode = #tpu.pipeline_mode<synchronous>, transform_indices = @transform_8, window_bounds = array<i64: 8, 72>}, {pipeline_mode = #tpu.pipeline_mode<synchronous>, transform_indices = @transform_9, window_bounds = array<i64: 8, 1>}, {pipeline_mode = #tpu.pipeline_mode<synchronous>, transform_indices = @transform_10, window_bounds = array<i64: 8, 1>}, {transform_indices = @transform_11, window_bounds = array<i64: 1, 8, 256>}]} {
    %c0 = arith.constant 0 : index
    %c0_0 = arith.constant 0 : index
    %0 = vector.load %arg3[%c0, %c0_0] : memref<4x8xf32, #tpu.memory_space<vmem>>, vector<4x8xf32>
    %c0_1 = arith.constant 0 : index
    %c0_2 = arith.constant 0 : index
    %c0_3 = arith.constant 0 : index
    %1 = vector.load %arg1[%c0_1, %c0_2, %c0_3] : memref<1x8x64xf32, #tpu.memory_space<vmem>>, vector<1x8x64xf32>
    %2 = vector.shape_cast %1 : vector<1x8x64xf32> to vector<8x64xf32>
    %cst = arith.constant dense<0.000000e+00> : vector<4x64xf32>
    %3 = tpu.matmul %0, %2, %cst {dimension_numbers = #tpu.dot_dimension_numbers<[1], [0], [0], [1], [0, 0, 1, 1], [], []>} : vector<4x8xf32>, vector<8x64xf32>, vector<4x64xf32> -> vector<4x64xf32>
    %c0_4 = arith.constant 0 : index
    %c0_5 = arith.constant 0 : index
    %4 = vector.load %arg4[%c0_4, %c0_5] : memref<4x1xf32, #tpu.memory_space<vmem>>, vector<4x1xf32>
    %5 = vector.broadcast %4 : vector<4x1xf32> to vector<4x64xf32>
    %6 = arith.addf %3, %5 : vector<4x64xf32>
    %c0_6 = arith.constant 0 : index
    %c0_7 = arith.constant 0 : index
    %7 = vector.load %arg5[%c0_6, %c0_7] : memref<64x256xf32, #tpu.memory_space<vmem>>, vector<64x256xf32>
    %cst_8 = arith.constant dense<0.000000e+00> : vector<4x256xf32>
    %8 = tpu.matmul %6, %7, %cst_8 {dimension_numbers = #tpu.dot_dimension_numbers<[1], [0], [0], [1], [0, 0, 1, 1], [], []>} : vector<4x64xf32>, vector<64x256xf32>, vector<4x256xf32> -> vector<4x256xf32>
    %c0_9 = arith.constant 0 : index
    %c0_10 = arith.constant 0 : index
    %c0_11 = arith.constant 0 : index
    %9 = vector.load %arg2[%c0_9, %c0_10, %c0_11] : memref<1x4x256xf32, #tpu.memory_space<vmem>>, vector<1x4x256xf32>
    %10 = vector.shape_cast %9 : vector<1x4x256xf32> to vector<4x256xf32>
    %11 = tpu.concatenate %10, %8 in 0 : vector<4x256xf32>, vector<4x256xf32> -> vector<8x256xf32>
    %12 = tpu.iota {dimensions = array<i32: 1>} : vector<1x256xi32>
    %c16_i32 = arith.constant 16 : i32
    %c0_i32 = arith.constant 0 : i32
    %13 = arith.cmpi eq, %c16_i32, %c0_i32 : i32
    %c1_i32 = arith.constant 1 : i32
    %14 = arith.select %13, %c1_i32, %c16_i32 : i32
    %15 = vector.broadcast %14 : i32 to vector<1x256xi32>
    %16 = arith.remsi %12, %15 : vector<1x256xi32>
    %c0_i32_12 = arith.constant 0 : i32
    %17 = vector.broadcast %c0_i32_12 : i32 to vector<1x256xi32>
    %18 = arith.cmpi ne, %16, %17 : vector<1x256xi32>
    %c0_i32_13 = arith.constant 0 : i32
    %19 = vector.broadcast %c0_i32_13 : i32 to vector<1x256xi32>
    %20 = arith.cmpi slt, %16, %19 : vector<1x256xi32>
    %c0_i32_14 = arith.constant 0 : i32
    %21 = arith.cmpi slt, %14, %c0_i32_14 : i32
    %22 = vector.broadcast %21 : i1 to vector<1x256xi1>
    %23 = vector.broadcast %22 : vector<1x256xi1> to vector<1x256xi1>
    %24 = arith.xori %20, %23 : vector<1x256xi1>
    %25 = arith.andi %24, %18 : vector<1x256xi1>
    %26 = vector.broadcast %14 : i32 to vector<1x256xi32>
    %27 = arith.addi %16, %26 : vector<1x256xi32>
    %28 = arith.select %25, %27, %16 : vector<1x256xi1>, vector<1x256xi32>
    %c1_i32_15 = arith.constant 1 : i32
    %29 = vector.broadcast %c1_i32_15 : i32 to vector<1x256xi32>
    %30 = arith.cmpi sge, %28, %29 : vector<1x256xi32>
    %31 = arith.extui %30 : vector<1x256xi1> to vector<1x256xi32>
    %32 = arith.sitofp %31 : vector<1x256xi32> to vector<1x256xf32>
    %c14_i32 = arith.constant 14 : i32
    %33 = vector.broadcast %c14_i32 : i32 to vector<1x256xi32>
    %34 = arith.cmpi sle, %28, %33 : vector<1x256xi32>
    %35 = arith.extui %34 : vector<1x256xi1> to vector<1x256xi32>
    %36 = arith.sitofp %35 : vector<1x256xi32> to vector<1x256xf32>
    %cst_16 = arith.constant 0.000000e+00 : f32
    %37 = vector.broadcast %cst_16 : f32 to vector<8x17xf32>
    %38 = vector.extract_strided_slice %11 {offsets = [0, 0], sizes = [8, 239], strides = [1, 1]} : vector<8x256xf32> to vector<8x239xf32>
    %39 = tpu.concatenate %37, %38 in 1 : vector<8x17xf32>, vector<8x239xf32> -> vector<8x256xf32>
    %40 = vector.broadcast %32 : vector<1x256xf32> to vector<8x256xf32>
    %41 = arith.mulf %39, %40 : vector<8x256xf32>
    %cst_17 = arith.constant 0.000000e+00 : f32
    %42 = vector.broadcast %cst_17 : f32 to vector<8x16xf32>
    %43 = vector.extract_strided_slice %11 {offsets = [0, 0], sizes = [8, 240], strides = [1, 1]} : vector<8x256xf32> to vector<8x240xf32>
    %44 = tpu.concatenate %42, %43 in 1 : vector<8x16xf32>, vector<8x240xf32> -> vector<8x256xf32>
    %cst_18 = arith.constant 0.000000e+00 : f32
    %45 = vector.broadcast %cst_18 : f32 to vector<8x15xf32>
    %46 = vector.extract_strided_slice %11 {offsets = [0, 0], sizes = [8, 241], strides = [1, 1]} : vector<8x256xf32> to vector<8x241xf32>
    %47 = tpu.concatenate %45, %46 in 1 : vector<8x15xf32>, vector<8x241xf32> -> vector<8x256xf32>
    %48 = vector.broadcast %36 : vector<1x256xf32> to vector<8x256xf32>
    %49 = arith.mulf %47, %48 : vector<8x256xf32>
    %cst_19 = arith.constant 0.000000e+00 : f32
    %50 = vector.broadcast %cst_19 : f32 to vector<8x1xf32>
    %51 = vector.extract_strided_slice %11 {offsets = [0, 0], sizes = [8, 255], strides = [1, 1]} : vector<8x256xf32> to vector<8x255xf32>
    %52 = tpu.concatenate %50, %51 in 1 : vector<8x1xf32>, vector<8x255xf32> -> vector<8x256xf32>
    %53 = vector.broadcast %32 : vector<1x256xf32> to vector<8x256xf32>
    %54 = arith.mulf %52, %53 : vector<8x256xf32>
    %55 = vector.extract_strided_slice %11 {offsets = [0, 1], sizes = [8, 255], strides = [1, 1]} : vector<8x256xf32> to vector<8x255xf32>
    %cst_20 = arith.constant 0.000000e+00 : f32
    %56 = vector.broadcast %cst_20 : f32 to vector<8x1xf32>
    %57 = tpu.concatenate %55, %56 in 1 : vector<8x255xf32>, vector<8x1xf32> -> vector<8x256xf32>
    %58 = vector.broadcast %36 : vector<1x256xf32> to vector<8x256xf32>
    %59 = arith.mulf %57, %58 : vector<8x256xf32>
    %60 = vector.extract_strided_slice %11 {offsets = [0, 15], sizes = [8, 241], strides = [1, 1]} : vector<8x256xf32> to vector<8x241xf32>
    %cst_21 = arith.constant 0.000000e+00 : f32
    %61 = vector.broadcast %cst_21 : f32 to vector<8x15xf32>
    %62 = tpu.concatenate %60, %61 in 1 : vector<8x241xf32>, vector<8x15xf32> -> vector<8x256xf32>
    %63 = vector.broadcast %32 : vector<1x256xf32> to vector<8x256xf32>
    %64 = arith.mulf %62, %63 : vector<8x256xf32>
    %65 = vector.extract_strided_slice %11 {offsets = [0, 16], sizes = [8, 240], strides = [1, 1]} : vector<8x256xf32> to vector<8x240xf32>
    %cst_22 = arith.constant 0.000000e+00 : f32
    %66 = vector.broadcast %cst_22 : f32 to vector<8x16xf32>
    %67 = tpu.concatenate %65, %66 in 1 : vector<8x240xf32>, vector<8x16xf32> -> vector<8x256xf32>
    %68 = vector.extract_strided_slice %11 {offsets = [0, 17], sizes = [8, 239], strides = [1, 1]} : vector<8x256xf32> to vector<8x239xf32>
    %cst_23 = arith.constant 0.000000e+00 : f32
    %69 = vector.broadcast %cst_23 : f32 to vector<8x17xf32>
    %70 = tpu.concatenate %68, %69 in 1 : vector<8x239xf32>, vector<8x17xf32> -> vector<8x256xf32>
    %71 = vector.broadcast %36 : vector<1x256xf32> to vector<8x256xf32>
    %72 = arith.mulf %70, %71 : vector<8x256xf32>
    %73 = tpu.concatenate %41, %44, %49, %54, %11, %59, %64, %67, %72 in 0 : vector<8x256xf32>, vector<8x256xf32>, vector<8x256xf32>, vector<8x256xf32>, vector<8x256xf32>, vector<8x256xf32>, vector<8x256xf32>, vector<8x256xf32>, vector<8x256xf32> -> vector<72x256xf32>
    %c0_24 = arith.constant 0 : index
    %c0_25 = arith.constant 0 : index
    %74 = vector.load %arg6[%c0_24, %c0_25] : memref<8x72xf32, #tpu.memory_space<vmem>>, vector<8x72xf32>
    %cst_26 = arith.constant dense<0.000000e+00> : vector<8x256xf32>
    %75 = tpu.matmul %74, %73, %cst_26 {dimension_numbers = #tpu.dot_dimension_numbers<[1], [0], [0], [1], [0, 0, 1, 1], [], []>} : vector<8x72xf32>, vector<72x256xf32>, vector<8x256xf32> -> vector<8x256xf32>
    %c0_27 = arith.constant 0 : index
    %c0_28 = arith.constant 0 : index
    %76 = vector.load %arg7[%c0_27, %c0_28] : memref<8x1xf32, #tpu.memory_space<vmem>>, vector<8x1xf32>
    %77 = vector.broadcast %76 : vector<8x1xf32> to vector<8x256xf32>
    %78 = arith.mulf %75, %77 : vector<8x256xf32>
    %c0_29 = arith.constant 0 : index
    %c0_30 = arith.constant 0 : index
    %79 = vector.load %arg8[%c0_29, %c0_30] : memref<8x1xf32, #tpu.memory_space<vmem>>, vector<8x1xf32>
    %80 = vector.broadcast %79 : vector<8x1xf32> to vector<8x256xf32>
    %81 = arith.addf %78, %80 : vector<8x256xf32>
    %cst_31 = arith.constant 0.000000e+00 : f32
    %82 = vector.broadcast %cst_31 : f32 to vector<8x256xf32>
    %83 = arith.cmpf ogt, %81, %82 : vector<8x256xf32>
    %cst_32 = arith.constant 0.00999999977 : f32
    %84 = vector.broadcast %cst_32 : f32 to vector<8x256xf32>
    %85 = arith.mulf %84, %81 : vector<8x256xf32>
    %86 = arith.select %83, %81, %85 : vector<8x256xi1>, vector<8x256xf32>
    %87 = tpu.iota {dimensions = array<i32: 1>} : vector<1x256xi32>
    %c16_i32_33 = arith.constant 16 : i32
    %c0_i32_34 = arith.constant 0 : i32
    %88 = arith.cmpi eq, %c16_i32_33, %c0_i32_34 : i32
    %c1_i32_35 = arith.constant 1 : i32
    %89 = arith.select %88, %c1_i32_35, %c16_i32_33 : i32
    %90 = vector.broadcast %89 : i32 to vector<1x256xi32>
    %91 = arith.remsi %87, %90 : vector<1x256xi32>
    %c0_i32_36 = arith.constant 0 : i32
    %92 = vector.broadcast %c0_i32_36 : i32 to vector<1x256xi32>
    %93 = arith.cmpi ne, %91, %92 : vector<1x256xi32>
    %c0_i32_37 = arith.constant 0 : i32
    %94 = vector.broadcast %c0_i32_37 : i32 to vector<1x256xi32>
    %95 = arith.cmpi slt, %91, %94 : vector<1x256xi32>
    %c0_i32_38 = arith.constant 0 : i32
    %96 = arith.cmpi slt, %89, %c0_i32_38 : i32
    %97 = vector.broadcast %96 : i1 to vector<1x256xi1>
    %98 = vector.broadcast %97 : vector<1x256xi1> to vector<1x256xi1>
    %99 = arith.xori %95, %98 : vector<1x256xi1>
    %100 = arith.andi %99, %93 : vector<1x256xi1>
    %101 = vector.broadcast %89 : i32 to vector<1x256xi32>
    %102 = arith.addi %91, %101 : vector<1x256xi32>
    %103 = arith.select %100, %102, %91 : vector<1x256xi1>, vector<1x256xi32>
    %c1_i32_39 = arith.constant 1 : i32
    %104 = vector.broadcast %c1_i32_39 : i32 to vector<1x256xi32>
    %105 = arith.cmpi sge, %103, %104 : vector<1x256xi32>
    %106 = arith.extui %105 : vector<1x256xi1> to vector<1x256xi32>
    %107 = arith.sitofp %106 : vector<1x256xi32> to vector<1x256xf32>
    %c14_i32_40 = arith.constant 14 : i32
    %108 = vector.broadcast %c14_i32_40 : i32 to vector<1x256xi32>
    %109 = arith.cmpi sle, %103, %108 : vector<1x256xi32>
    %110 = arith.extui %109 : vector<1x256xi1> to vector<1x256xi32>
    %111 = arith.sitofp %110 : vector<1x256xi32> to vector<1x256xf32>
    %cst_41 = arith.constant 0.000000e+00 : f32
    %112 = vector.broadcast %cst_41 : f32 to vector<8x17xf32>
    %113 = vector.extract_strided_slice %86 {offsets = [0, 0], sizes = [8, 239], strides = [1, 1]} : vector<8x256xf32> to vector<8x239xf32>
    %114 = tpu.concatenate %112, %113 in 1 : vector<8x17xf32>, vector<8x239xf32> -> vector<8x256xf32>
    %115 = vector.broadcast %107 : vector<1x256xf32> to vector<8x256xf32>
    %116 = arith.mulf %114, %115 : vector<8x256xf32>
    %cst_42 = arith.constant 0.000000e+00 : f32
    %117 = vector.broadcast %cst_42 : f32 to vector<8x16xf32>
    %118 = vector.extract_strided_slice %86 {offsets = [0, 0], sizes = [8, 240], strides = [1, 1]} : vector<8x256xf32> to vector<8x240xf32>
    %119 = tpu.concatenate %117, %118 in 1 : vector<8x16xf32>, vector<8x240xf32> -> vector<8x256xf32>
    %cst_43 = arith.constant 0.000000e+00 : f32
    %120 = vector.broadcast %cst_43 : f32 to vector<8x15xf32>
    %121 = vector.extract_strided_slice %86 {offsets = [0, 0], sizes = [8, 241], strides = [1, 1]} : vector<8x256xf32> to vector<8x241xf32>
    %122 = tpu.concatenate %120, %121 in 1 : vector<8x15xf32>, vector<8x241xf32> -> vector<8x256xf32>
    %123 = vector.broadcast %111 : vector<1x256xf32> to vector<8x256xf32>
    %124 = arith.mulf %122, %123 : vector<8x256xf32>
    %cst_44 = arith.constant 0.000000e+00 : f32
    %125 = vector.broadcast %cst_44 : f32 to vector<8x1xf32>
    %126 = vector.extract_strided_slice %86 {offsets = [0, 0], sizes = [8, 255], strides = [1, 1]} : vector<8x256xf32> to vector<8x255xf32>
    %127 = tpu.concatenate %125, %126 in 1 : vector<8x1xf32>, vector<8x255xf32> -> vector<8x256xf32>
    %128 = vector.broadcast %107 : vector<1x256xf32> to vector<8x256xf32>
    %129 = arith.mulf %127, %128 : vector<8x256xf32>
    %130 = vector.extract_strided_slice %86 {offsets = [0, 1], sizes = [8, 255], strides = [1, 1]} : vector<8x256xf32> to vector<8x255xf32>
    %cst_45 = arith.constant 0.000000e+00 : f32
    %131 = vector.broadcast %cst_45 : f32 to vector<8x1xf32>
    %132 = tpu.concatenate %130, %131 in 1 : vector<8x255xf32>, vector<8x1xf32> -> vector<8x256xf32>
    %133 = vector.broadcast %111 : vector<1x256xf32> to vector<8x256xf32>
    %134 = arith.mulf %132, %133 : vector<8x256xf32>
    %135 = vector.extract_strided_slice %86 {offsets = [0, 15], sizes = [8, 241], strides = [1, 1]} : vector<8x256xf32> to vector<8x241xf32>
    %cst_46 = arith.constant 0.000000e+00 : f32
    %136 = vector.broadcast %cst_46 : f32 to vector<8x15xf32>
    %137 = tpu.concatenate %135, %136 in 1 : vector<8x241xf32>, vector<8x15xf32> -> vector<8x256xf32>
    %138 = vector.broadcast %107 : vector<1x256xf32> to vector<8x256xf32>
    %139 = arith.mulf %137, %138 : vector<8x256xf32>
    %140 = vector.extract_strided_slice %86 {offsets = [0, 16], sizes = [8, 240], strides = [1, 1]} : vector<8x256xf32> to vector<8x240xf32>
    %cst_47 = arith.constant 0.000000e+00 : f32
    %141 = vector.broadcast %cst_47 : f32 to vector<8x16xf32>
    %142 = tpu.concatenate %140, %141 in 1 : vector<8x240xf32>, vector<8x16xf32> -> vector<8x256xf32>
    %143 = vector.extract_strided_slice %86 {offsets = [0, 17], sizes = [8, 239], strides = [1, 1]} : vector<8x256xf32> to vector<8x239xf32>
    %cst_48 = arith.constant 0.000000e+00 : f32
    %144 = vector.broadcast %cst_48 : f32 to vector<8x17xf32>
    %145 = tpu.concatenate %143, %144 in 1 : vector<8x239xf32>, vector<8x17xf32> -> vector<8x256xf32>
    %146 = vector.broadcast %111 : vector<1x256xf32> to vector<8x256xf32>
    %147 = arith.mulf %145, %146 : vector<8x256xf32>
    %148 = tpu.concatenate %116, %119, %124, %129, %86, %134, %139, %142, %147 in 0 : vector<8x256xf32>, vector<8x256xf32>, vector<8x256xf32>, vector<8x256xf32>, vector<8x256xf32>, vector<8x256xf32>, vector<8x256xf32>, vector<8x256xf32>, vector<8x256xf32> -> vector<72x256xf32>
    %c0_49 = arith.constant 0 : index
    %c0_50 = arith.constant 0 : index
    %149 = vector.load %arg9[%c0_49, %c0_50] : memref<8x72xf32, #tpu.memory_space<vmem>>, vector<8x72xf32>
    %cst_51 = arith.constant dense<0.000000e+00> : vector<8x256xf32>
    %150 = tpu.matmul %149, %148, %cst_51 {dimension_numbers = #tpu.dot_dimension_numbers<[1], [0], [0], [1], [0, 0, 1, 1], [], []>} : vector<8x72xf32>, vector<72x256xf32>, vector<8x256xf32> -> vector<8x256xf32>
    %c0_52 = arith.constant 0 : index
    %c0_53 = arith.constant 0 : index
    %151 = vector.load %arg10[%c0_52, %c0_53] : memref<8x1xf32, #tpu.memory_space<vmem>>, vector<8x1xf32>
    %152 = vector.broadcast %151 : vector<8x1xf32> to vector<8x256xf32>
    %153 = arith.mulf %150, %152 : vector<8x256xf32>
    %c0_54 = arith.constant 0 : index
    %c0_55 = arith.constant 0 : index
    %154 = vector.load %arg11[%c0_54, %c0_55] : memref<8x1xf32, #tpu.memory_space<vmem>>, vector<8x1xf32>
    %155 = vector.broadcast %154 : vector<8x1xf32> to vector<8x256xf32>
    %156 = arith.addf %153, %155 : vector<8x256xf32>
    %cst_56 = arith.constant 0.000000e+00 : f32
    %157 = vector.broadcast %cst_56 : f32 to vector<8x256xf32>
    %158 = arith.cmpf ogt, %156, %157 : vector<8x256xf32>
    %cst_57 = arith.constant 0.00999999977 : f32
    %159 = vector.broadcast %cst_57 : f32 to vector<8x256xf32>
    %160 = arith.mulf %159, %156 : vector<8x256xf32>
    %161 = arith.select %158, %156, %160 : vector<8x256xi1>, vector<8x256xf32>
    %c0_58 = arith.constant 0 : index
    %c0_59 = arith.constant 0 : index
    %c0_60 = arith.constant 0 : index
    %162 = vector.load %arg12[%c0_58, %c0_59, %c0_60] : memref<1x8x256xf32, #tpu.memory_space<vmem>>, vector<1x8x256xf32>
    %163 = vector.shape_cast %162 : vector<1x8x256xf32> to vector<8x256xf32>
    %164 = vector.shape_cast %161 : vector<8x256xf32> to vector<1x8x256xf32>
    tpu.vector_store %arg12[%c0_58, %c0_59, %c0_60], %164 {strides = array<i32>} : memref<1x8x256xf32, #tpu.memory_space<vmem>>, vector<1x8x256xf32>,
    return
  }
  func.func @transform_0(%arg0: i32) -> (i32, i32, i32) {
    %c0_i32 = arith.constant 0 : i32
    %c0_i32_0 = arith.constant 0 : i32
    %c0_i32_1 = arith.constant 0 : i32
    return %arg0, %c0_i32, %c0_i32_0 : i32, i32, i32
  }
  func.func @transform_1(%arg0: i32) -> (i32, i32, i32) {
    %c0_i32 = arith.constant 0 : i32
    %c0_i32_0 = arith.constant 0 : i32
    %c0_i32_1 = arith.constant 0 : i32
    return %arg0, %c0_i32, %c0_i32_0 : i32, i32, i32
  }
  func.func @transform_2(%arg0: i32) -> (i32, i32) {
    %c0_i32 = arith.constant 0 : i32
    %c0_i32_0 = arith.constant 0 : i32
    %c0_i32_1 = arith.constant 0 : i32
    return %c0_i32, %c0_i32_0 : i32, i32
  }
  func.func @transform_3(%arg0: i32) -> (i32, i32) {
    %c0_i32 = arith.constant 0 : i32
    %c0_i32_0 = arith.constant 0 : i32
    %c0_i32_1 = arith.constant 0 : i32
    return %c0_i32, %c0_i32_0 : i32, i32
  }
  func.func @transform_4(%arg0: i32) -> (i32, i32) {
    %c0_i32 = arith.constant 0 : i32
    %c0_i32_0 = arith.constant 0 : i32
    %c0_i32_1 = arith.constant 0 : i32
    return %c0_i32, %c0_i32_0 : i32, i32
  }
  func.func @transform_5(%arg0: i32) -> (i32, i32) {
    %c0_i32 = arith.constant 0 : i32
    %c0_i32_0 = arith.constant 0 : i32
    %c0_i32_1 = arith.constant 0 : i32
    return %c0_i32, %c0_i32_0 : i32, i32
  }
  func.func @transform_6(%arg0: i32) -> (i32, i32) {
    %c0_i32 = arith.constant 0 : i32
    %c0_i32_0 = arith.constant 0 : i32
    %c0_i32_1 = arith.constant 0 : i32
    return %c0_i32, %c0_i32_0 : i32, i32
  }
  func.func @transform_7(%arg0: i32) -> (i32, i32) {
    %c0_i32 = arith.constant 0 : i32
    %c0_i32_0 = arith.constant 0 : i32
    %c0_i32_1 = arith.constant 0 : i32
    return %c0_i32, %c0_i32_0 : i32, i32
  }
  func.func @transform_8(%arg0: i32) -> (i32, i32) {
    %c0_i32 = arith.constant 0 : i32
    %c0_i32_0 = arith.constant 0 : i32
    %c0_i32_1 = arith.constant 0 : i32
    return %c0_i32, %c0_i32_0 : i32, i32
  }
  func.func @transform_9(%arg0: i32) -> (i32, i32) {
    %c0_i32 = arith.constant 0 : i32
    %c0_i32_0 = arith.constant 0 : i32
    %c0_i32_1 = arith.constant 0 : i32
    return %c0_i32, %c0_i32_0 : i32, i32
  }
  func.func @transform_10(%arg0: i32) -> (i32, i32) {
    %c0_i32 = arith.constant 0 : i32
    %c0_i32_0 = arith.constant 0 : i32
    %c0_i32_1 = arith.constant 0 : i32
    return %c0_i32, %c0_i32_0 : i32, i32
  }
  func.func @transform_11(%arg0: i32) -> (i32, i32, i32) {
    %c0_i32 = arith.constant 0 : i32
    %c0_i32_0 = arith.constant 0 : i32
    %c0_i32_1 = arith.constant 0 : i32
    return %arg0, %c0_i32, %c0_i32_0 : i32, i32, i32
  }
}

</mosaic_0001>

<llo_original>
// kernel: tpu_custom_call.1
$region0: #{tpu_custom_call.1}
  #allocation0 [shape = 'u32[]', space=smem, size = 0x4, offset = 0x4, fixed_abs, tag = 'smem constant byte address 0x4 - core index']
  #allocation1 [shape = 'u32[72,128]{1,0:T(1,128)}', space=vmem, size = 0x9000, scoped, tag = 'internal scratch']
  %s0 = inlined_call_operand.vmem [shape: f32[2,8,64], index: 0, kind: input, shape index: {}]
  %s1 = inlined_call_operand.vmem [shape: f32[2,4,256], index: 1, kind: input, shape index: {}]
  %s2 = inlined_call_operand.vmem [shape: f32[4,8], index: 2, kind: input, shape index: {}]
  %s3 = inlined_call_operand.vmem [shape: f32[4,1], index: 3, kind: input, shape index: {}]
  %s4 = inlined_call_operand.hbm [shape: f32[64,256], index: 4, kind: input, shape index: {}]
  %s5 = inlined_call_operand.hbm [shape: f32[8,72], index: 5, kind: input, shape index: {}]
  %s6 = inlined_call_operand.vmem [shape: f32[8,1], index: 6, kind: input, shape index: {}]
  %s7 = inlined_call_operand.vmem [shape: f32[8,1], index: 7, kind: input, shape index: {}]
  %s8 = inlined_call_operand.hbm [shape: f32[8,72], index: 8, kind: input, shape index: {}]
  %s9 = inlined_call_operand.vmem [shape: f32[8,1], index: 9, kind: input, shape index: {}]
  %s10 = inlined_call_operand.vmem [shape: f32[8,1], index: 10, kind: input, shape index: {}]
  %s11 = inlined_call_operand.hbm [shape: f32[2,8,256], index: 11, kind: output, shape index: {}]
  %s12 = sld [smem:[#allocation0]]
  $region89: #{tpu_custom_call.1} parent=0
    _
  %s14 = ssub.s32 1, %s12
  %s15 = scalar_select 0, %s14, %s12
  $region1: #{tpu_custom_call.1} parent=0
    #allocation2 [shape = 'u8[65536]{0}', space=vmem, size = 0x10000, scoped, tag = 'input window, operand 4, single buffered']
    #allocation3 [shape = 's32[2]{0}', space=sflag, size = 0x8, scoped, tag = 'scoped memory for tpu_custom_call.1']
    #allocation4 [shape = 's32[2]{0}', space=sflag, size = 0x8, scoped, tag = 'scoped memory for tpu_custom_call.1']
    #allocation5 [shape = 'u8[4096]{0}', space=vmem, size = 0x1000, scoped, tag = 'input window, operand 5, single buffered']
    #allocation6 [shape = 's32[1]{0}', space=sflag, size = 0x4, scoped, tag = 'scoped memory for tpu_custom_call.1']
    #allocation7 [shape = 'u8[4096]{0}', space=vmem, size = 0x1000, scoped, tag = 'input window, operand 8, single buffered']
    #allocation8 [shape = 'u8[16384]{0}', space=vmem, size = 0x4000, scoped, tag = 'output window, operand 0']
    %16 = vsyncpa [#allocation3], 0
    %17 = vsyncpa [#allocation6], 0
    %18 = vsyncpa [#allocation4], 0
    %s19 = scalar_lea.sflag [#allocation4], 1
    %20 = vsyncpa %s19, 0
    loop: start=0, step=1, limit=4
    $region2: #{tpu_custom_call.1} parent=1 // loop_pre_header
      _
    $region3: #{tpu_custom_call.1} parent=1 // loop_header
      %s22 = sphi 0, %s26
      %p23 = scmp.ge.s32.totalorder %s22, 4
      %s32 = sphi 0, %s34
      %s35 = sphi 0, %s32
      %s36 = sphi 0, %s35
      %s52 = sphi 0, %s36
      %s58 = sphi 0, %s60
      %s61 = sphi 0, %s58
      %s62 = sphi 0, %s61
      %s78 = sphi 0, %s62
      %s82 = sphi 0, %s82
      %s84 = sphi 0, %s82
      %s85 = sphi 0, %s84
      %s99 = sphi 0, %s85
      %s103 = sphi 0, %s103
      %s105 = sphi 0, %s103
      %s106 = sphi 0, %s105
      %s120 = sphi 0, %s106
      %s124 = sphi 0, %s124
      %s126 = sphi 0, %s124
      %s127 = sphi 0, %s126
      %s141 = sphi 0, %s127
      %s145 = sphi 0, %s145
      %s147 = sphi 0, %s145
      %s148 = sphi 0, %s147
      %s162 = sphi 0, %s148
      %s166 = sphi 0, %s166
      %s168 = sphi 0, %s166
      %s169 = sphi 0, %s168
      %s183 = sphi 0, %s169
      %s187 = sphi 0, %s187
      %s189 = sphi 0, %s187
      %s190 = sphi 0, %s189
      %s204 = sphi 0, %s190
      %s208 = sphi 0, %s208
      %s210 = sphi 0, %s208
      %s211 = sphi 0, %s210
      %s225 = sphi 0, %s211
      %s229 = sphi 0, %s229
      %s231 = sphi 0, %s229
      %s232 = sphi 0, %s231
      %s246 = sphi 0, %s232
      %s250 = sphi 0, %s250
      %s252 = sphi 0, %s250
      %s253 = sphi 0, %s252
      %s267 = sphi 0, %s253
      %s273 = sphi 0, %s275
      %s276 = sphi 0, %s273
      %s277 = sphi 0, %s276
      %s293 = sphi 0, %s277
    $region4: #{tpu_custom_call.1} parent=1 // loop_header_branch
      %25 = sbr.rel (%p23) target = $region8
    $region5: #{tpu_custom_call.1} parent=1 // loop_body
      %s27 = ssub.s32 %s22, 1
      %s28 = ssub.s32 %s22, 2
      %s29 = sadd.s32 %s22, 1
      %s30 = ssub.s32 %s22, %s29
      %p31 = scmp.eq.s32.totalorder %s30, 0
      %s33 = sadd.s32 %s32, 1
      %s34 = scalar_select %p31, %s32, %s33
      %p37 = pneg %p31
      %p38 = scmp.eq.s32.totalorder %s22, 1
      %p39 = por %p37, %p38
      %p40 = scmp.ne.s32.totalorder %s32, %s35
      %p41 = scmp.eq.s32.totalorder %s22, 0
      %p42 = por %p40, %p41
      %p43 = scmp.ne.s32.totalorder %s32, %s35
      %p44 = scmp.eq.s32.totalorder %s27, 1
      %p45 = por %p43, %p44
      %p46 = scmp.ne.s32.totalorder %s35, %s36
      %p47 = scmp.eq.s32.totalorder %s27, 0
      %p48 = por %p46, %p47
      %p49 = scmp.ne.s32.totalorder %s35, %s36
      %p50 = scmp.eq.s32.totalorder %s28, 1
      %p51 = por %p49, %p50
      %p53 = scmp.ne.s32.totalorder %s36, %s52
      %p54 = scmp.eq.s32.totalorder %s28, 0
      %p55 = por %p53, %p54
      %s56 = ssub.s32 %s22, %s29
      %p57 = scmp.eq.s32.totalorder %s56, 0
      %s59 = sadd.s32 %s58, 1
      %s60 = scalar_select %p57, %s58, %s59
      %p63 = pneg %p57
      %p64 = scmp.eq.s32.totalorder %s22, 1
      %p65 = por %p63, %p64
      %p66 = scmp.ne.s32.totalorder %s58, %s61
      %p67 = scmp.eq.s32.totalorder %s22, 0
      %p68 = por %p66, %p67
      %p69 = scmp.ne.s32.totalorder %s58, %s61
      %p70 = scmp.eq.s32.totalorder %s27, 1
      %p71 = por %p69, %p70
      %p72 = scmp.ne.s32.totalorder %s61, %s62
      %p73 = scmp.eq.s32.totalorder %s27, 0
      %p74 = por %p72, %p73
      %p75 = scmp.ne.s32.totalorder %s61, %s62
      %p76 = scmp.eq.s32.totalorder %s28, 1
      %p77 = por %p75, %p76
      %p79 = scmp.ne.s32.totalorder %s62, %s78
      %p80 = scmp.eq.s32.totalorder %s28, 0
      %p81 = por %p79, %p80
      %s83 = sadd.s32 %s82, 1
      %p86 = scmp.eq.s32.totalorder %s22, 1
      %p87 = scmp.ne.s32.totalorder %s82, %s84
      %p88 = scmp.eq.s32.totalorder %s22, 0
      %p89 = por %p87, %p88
      %p90 = scmp.ne.s32.totalorder %s82, %s84
      %p91 = scmp.eq.s32.totalorder %s27, 1
      %p92 = por %p90, %p91
      %p93 = scmp.ne.s32.totalorder %s84, %s85
      %p94 = scmp.eq.s32.totalorder %s27, 0
      %p95 = por %p93, %p94
      %p96 = scmp.ne.s32.totalorder %s84, %s85
      %p97 = scmp.eq.s32.totalorder %s28, 1
      %p98 = por %p96, %p97
      %p100 = scmp.ne.s32.totalorder %s85, %s99
      %p101 = scmp.eq.s32.totalorder %s28, 0
      %p102 = por %p100, %p101
      %s104 = sadd.s32 %s103, 1
      %p107 = scmp.eq.s32.totalorder %s22, 1
      %p108 = scmp.ne.s32.totalorder %s103, %s105
      %p109 = scmp.eq.s32.totalorder %s22, 0
      %p110 = por %p108, %p109
      %p111 = scmp.ne.s32.totalorder %s103, %s105
      %p112 = scmp.eq.s32.totalorder %s27, 1
      %p113 = por %p111, %p112
      %p114 = scmp.ne.s32.totalorder %s105, %s106
      %p115 = scmp.eq.s32.totalorder %s27, 0
      %p116 = por %p114, %p115
      %p117 = scmp.ne.s32.totalorder %s105, %s106
      %p118 = scmp.eq.s32.totalorder %s28, 1
      %p119 = por %p117, %p118
      %p121 = scmp.ne.s32.totalorder %s106, %s120
      %p122 = scmp.eq.s32.totalorder %s28, 0
      %p123 = por %p121, %p122
      %s125 = sadd.s32 %s124, 1
      %p128 = scmp.eq.s32.totalorder %s22, 1
      %p129 = scmp.ne.s32.totalorder %s124, %s126
      %p130 = scmp.eq.s32.totalorder %s22, 0
      %p131 = por %p129, %p130
      %p132 = scmp.ne.s32.totalorder %s124, %s126
      %p133 = scmp.eq.s32.totalorder %s27, 1
      %p134 = por %p132, %p133
      %p135 = scmp.ne.s32.totalorder %s126, %s127
      %p136 = scmp.eq.s32.totalorder %s27, 0
      %p137 = por %p135, %p136
      %p138 = scmp.ne.s32.totalorder %s126, %s127
      %p139 = scmp.eq.s32.totalorder %s28, 1
      %p140 = por %p138, %p139
      %p142 = scmp.ne.s32.totalorder %s127, %s141
      %p143 = scmp.eq.s32.totalorder %s28, 0
      %p144 = por %p142, %p143
      %s146 = sadd.s32 %s145, 1
      %p149 = scmp.eq.s32.totalorder %s22, 1
      %p150 = scmp.ne.s32.totalorder %s145, %s147
      %p151 = scmp.eq.s32.totalorder %s22, 0
      %p152 = por %p150, %p151
      %p153 = scmp.ne.s32.totalorder %s145, %s147
      %p154 = scmp.eq.s32.totalorder %s27, 1
      %p155 = por %p153, %p154
      %p156 = scmp.ne.s32.totalorder %s147, %s148
      %p157 = scmp.eq.s32.totalorder %s27, 0
      %p158 = por %p156, %p157
      %p159 = scmp.ne.s32.totalorder %s147, %s148
      %p160 = scmp.eq.s32.totalorder %s28, 1
      %p161 = por %p159, %p160
      %p163 = scmp.ne.s32.totalorder %s148, %s162
      %p164 = scmp.eq.s32.totalorder %s28, 0
      %p165 = por %p163, %p164
      %s167 = sadd.s32 %s166, 1
      %p170 = scmp.eq.s32.totalorder %s22, 1
      %p171 = scmp.ne.s32.totalorder %s166, %s168
      %p172 = scmp.eq.s32.totalorder %s22, 0
      %p173 = por %p171, %p172
      %p174 = scmp.ne.s32.totalorder %s166, %s168
      %p175 = scmp.eq.s32.totalorder %s27, 1
      %p176 = por %p174, %p175
      %p177 = scmp.ne.s32.totalorder %s168, %s169
      %p178 = scmp.eq.s32.totalorder %s27, 0
      %p179 = por %p177, %p178
      %p180 = scmp.ne.s32.totalorder %s168, %s169
      %p181 = scmp.eq.s32.totalorder %s28, 1
      %p182 = por %p180, %p181
      %p184 = scmp.ne.s32.totalorder %s169, %s183
      %p185 = scmp.eq.s32.totalorder %s28, 0
      %p186 = por %p184, %p185
      %s188 = sadd.s32 %s187, 1
      %p191 = scmp.eq.s32.totalorder %s22, 1
      %p192 = scmp.ne.s32.totalorder %s187, %s189
      %p193 = scmp.eq.s32.totalorder %s22, 0
      %p194 = por %p192, %p193
      %p195 = scmp.ne.s32.totalorder %s187, %s189
      %p196 = scmp.eq.s32.totalorder %s27, 1
      %p197 = por %p195, %p196
      %p198 = scmp.ne.s32.totalorder %s189, %s190
      %p199 = scmp.eq.s32.totalorder %s27, 0
      %p200 = por %p198, %p199
      %p201 = scmp.ne.s32.totalorder %s189, %s190
      %p202 = scmp.eq.s32.totalorder %s28, 1
      %p203 = por %p201, %p202
      %p205 = scmp.ne.s32.totalorder %s190, %s204
      %p206 = scmp.eq.s32.totalorder %s28, 0
      %p207 = por %p205, %p206
      %s209 = sadd.s32 %s208, 1
      %p212 = scmp.eq.s32.totalorder %s22, 1
      %p213 = scmp.ne.s32.totalorder %s208, %s210
      %p214 = scmp.eq.s32.totalorder %s22, 0
      %p215 = por %p213, %p214
      %p216 = scmp.ne.s32.totalorder %s208, %s210
      %p217 = scmp.eq.s32.totalorder %s27, 1
      %p218 = por %p216, %p217
      %p219 = scmp.ne.s32.totalorder %s210, %s211
      %p220 = scmp.eq.s32.totalorder %s27, 0
      %p221 = por %p219, %p220
      %p222 = scmp.ne.s32.totalorder %s210, %s211
      %p223 = scmp.eq.s32.totalorder %s28, 1
      %p224 = por %p222, %p223
      %p226 = scmp.ne.s32.totalorder %s211, %s225
      %p227 = scmp.eq.s32.totalorder %s28, 0
      %p228 = por %p226, %p227
      %s230 = sadd.s32 %s229, 1
      %p233 = scmp.eq.s32.totalorder %s22, 1
      %p234 = scmp.ne.s32.totalorder %s229, %s231
      %p235 = scmp.eq.s32.totalorder %s22, 0
      %p236 = por %p234, %p235
      %p237 = scmp.ne.s32.totalorder %s229, %s231
      %p238 = scmp.eq.s32.totalorder %s27, 1
      %p239 = por %p237, %p238
      %p240 = scmp.ne.s32.totalorder %s231, %s232
      %p241 = scmp.eq.s32.totalorder %s27, 0
      %p242 = por %p240, %p241
      %p243 = scmp.ne.s32.totalorder %s231, %s232
      %p244 = scmp.eq.s32.totalorder %s28, 1
      %p245 = por %p243, %p244
      %p247 = scmp.ne.s32.totalorder %s232, %s246
      %p248 = scmp.eq.s32.totalorder %s28, 0
      %p249 = por %p247, %p248
      %s251 = sadd.s32 %s250, 1
      %p254 = scmp.eq.s32.totalorder %s22, 1
      %p255 = scmp.ne.s32.totalorder %s250, %s252
      %p256 = scmp.eq.s32.totalorder %s22, 0
      %p257 = por %p255, %p256
      %p258 = scmp.ne.s32.totalorder %s250, %s252
      %p259 = scmp.eq.s32.totalorder %s27, 1
      %p260 = por %p258, %p259
      %p261 = scmp.ne.s32.totalorder %s252, %s253
      %p262 = scmp.eq.s32.totalorder %s27, 0
      %p263 = por %p261, %p262
      %p264 = scmp.ne.s32.totalorder %s252, %s253
      %p265 = scmp.eq.s32.totalorder %s28, 1
      %p266 = por %p264, %p265
      %p268 = scmp.ne.s32.totalorder %s253, %s267
      %p269 = scmp.eq.s32.totalorder %s28, 0
      %p270 = por %p268, %p269
      %s271 = ssub.s32 %s22, %s29
      %p272 = scmp.eq.s32.totalorder %s271, 0
      %s274 = sadd.s32 %s273, 1
      %s275 = scalar_select %p272, %s273, %s274
      %p278 = pneg %p272
      %p279 = scmp.eq.s32.totalorder %s22, 1
      %p280 = por %p278, %p279
      %p281 = scmp.ne.s32.totalorder %s273, %s276
      %p282 = scmp.eq.s32.totalorder %s22, 0
      %p283 = por %p281, %p282
      %p284 = scmp.ne.s32.totalorder %s273, %s276
      %p285 = scmp.eq.s32.totalorder %s27, 1
      %p286 = por %p284, %p285
      %p287 = scmp.ne.s32.totalorder %s276, %s277
      %p288 = scmp.eq.s32.totalorder %s27, 0
      %p289 = por %p287, %p288
      %p290 = scmp.ne.s32.totalorder %s276, %s277
      %p291 = scmp.eq.s32.totalorder %s28, 1
      %p292 = por %p290, %p291
      %p294 = scmp.ne.s32.totalorder %s277, %s293
      %p295 = scmp.eq.s32.totalorder %s28, 0
      %p296 = por %p294, %p295
      %p297 = scmp.le.s32.totalorder 1, %s22
      %p298 = scmp.lt.s32.totalorder %s22, 3
      %p299 = pnand %p297, %p298
      %p300 = pneg %p299
      // Predicated region
      $region9: #{tpu_custom_call.1} parent=5 // pred_check
        _
      $region10: #{tpu_custom_call.1} parent=5 // pred_check_branch
        %302 = sbr.rel (%p299) target = $region12
      $region11: #{tpu_custom_call.1} parent=5 // pred_region
        %s303 = ssub.s32 %s22, 1
        // Predicated region
        $region13: #{tpu_custom_call.1} parent=11 // pred_check
          %p304 = pneg %p95
        $region14: #{tpu_custom_call.1} parent=11 // pred_check_branch
          %306 = sbr.rel (%p304) target = $region16
        $region15: #{tpu_custom_call.1} parent=11 // pred_region
          _
        $region16: #{tpu_custom_call.1} parent=11 // pred_fallthru
          _
        // Predicated region
        $region17: #{tpu_custom_call.1} parent=11 // pred_check
          %p307 = pneg %p116
        $region18: #{tpu_custom_call.1} parent=11 // pred_check_branch
          %309 = sbr.rel (%p307) target = $region20
        $region19: #{tpu_custom_call.1} parent=11 // pred_region
          _
        $region20: #{tpu_custom_call.1} parent=11 // pred_fallthru
          _
        // Predicated region
        $region21: #{tpu_custom_call.1} parent=11 // pred_check
          %p310 = pneg %p137
        $region22: #{tpu_custom_call.1} parent=11 // pred_check_branch
          %312 = sbr.rel (%p310) target = $region24
        $region23: #{tpu_custom_call.1} parent=11 // pred_region
          %314 = vsyncadd [#allocation3], 0
          %s315 = sshll.u32 %s4, 4
          %s316 = int_to_ptr.hbm [resolvable:$true] %s315
          %s317 = sshll.u32 [#allocation2], 4
          %s318 = int_to_ptr.vmem [resolvable:$true] %s317
          %323 = dma.hbm_to_vmem [thread:$0]  %s316, 2048, %s318, [#allocation3], 256, 256, 16
        $region24: #{tpu_custom_call.1} parent=11 // pred_fallthru
          _
        // Predicated region
        $region25: #{tpu_custom_call.1} parent=11 // pred_check
          %p324 = pneg %p158
        $region26: #{tpu_custom_call.1} parent=11 // pred_check_branch
          %326 = sbr.rel (%p324) target = $region28
        $region27: #{tpu_custom_call.1} parent=11 // pred_region
          %328 = vsyncadd [#allocation6], 0
          %s330 = sshll.u32 %s5, 4
          %s331 = int_to_ptr.hbm [resolvable:$true] %s330
          %s332 = sshll.u32 [#allocation5], 4
          %s333 = int_to_ptr.vmem [resolvable:$true] %s332
          %335 = dma.hbm_to_vmem [thread:$0]  %s331, 128, %s333, [#allocation6]
        $region28: #{tpu_custom_call.1} parent=11 // pred_fallthru
          _
        // Predicated region
        $region29: #{tpu_custom_call.1} parent=11 // pred_check
          %p336 = pneg %p179
        $region30: #{tpu_custom_call.1} parent=11 // pred_check_branch
          %338 = sbr.rel (%p336) target = $region32
        $region31: #{tpu_custom_call.1} parent=11 // pred_region
          _
        $region32: #{tpu_custom_call.1} parent=11 // pred_fallthru
          _
        // Predicated region
        $region33: #{tpu_custom_call.1} parent=11 // pred_check
          %p339 = pneg %p200
        $region34: #{tpu_custom_call.1} parent=11 // pred_check_branch
          %341 = sbr.rel (%p339) target = $region36
        $region35: #{tpu_custom_call.1} parent=11 // pred_region
          _
        $region36: #{tpu_custom_call.1} parent=11 // pred_fallthru
          _
        // Predicated region
        $region37: #{tpu_custom_call.1} parent=11 // pred_check
          %p342 = pneg %p221
        $region38: #{tpu_custom_call.1} parent=11 // pred_check_branch
          %344 = sbr.rel (%p342) target = $region40
        $region39: #{tpu_custom_call.1} parent=11 // pred_region
          %346 = vsyncadd [#allocation6], 0
          %s348 = sshll.u32 %s8, 4
          %s349 = int_to_ptr.hbm [resolvable:$true] %s348
          %s350 = sshll.u32 [#allocation7], 4
          %s351 = int_to_ptr.vmem [resolvable:$true] %s350
          %353 = dma.hbm_to_vmem [thread:$0]  %s349, 128, %s351, [#allocation6]
        $region40: #{tpu_custom_call.1} parent=11 // pred_fallthru
          _
        // Predicated region
        $region41: #{tpu_custom_call.1} parent=11 // pred_check
          %p354 = pneg %p242
        $region42: #{tpu_custom_call.1} parent=11 // pred_check_branch
          %356 = sbr.rel (%p354) target = $region44
        $region43: #{tpu_custom_call.1} parent=11 // pred_region
          _
        $region44: #{tpu_custom_call.1} parent=11 // pred_fallthru
          _
        // Predicated region
        $region45: #{tpu_custom_call.1} parent=11 // pred_check
          %p357 = pneg %p263
        $region46: #{tpu_custom_call.1} parent=11 // pred_check_branch
          %359 = sbr.rel (%p357) target = $region48
        $region47: #{tpu_custom_call.1} parent=11 // pred_region
          _
        $region48: #{tpu_custom_call.1} parent=11 // pred_fallthru
          _
      $region12: #{tpu_custom_call.1} parent=5 // pred_fallthru
        _
      %p360 = scmp.lt.s32.totalorder %s22, 2
      // Predicated region
      $region49: #{tpu_custom_call.1} parent=5 // pred_check
        %p361 = pneg %p360
      $region50: #{tpu_custom_call.1} parent=5 // pred_check_branch
        %363 = sbr.rel (%p361) target = $region52
      $region51: #{tpu_custom_call.1} parent=5 // pred_region
        // Predicated region
        $region53: #{tpu_custom_call.1} parent=51 // pred_check
          %p364 = pneg %p42
        $region54: #{tpu_custom_call.1} parent=51 // pred_check_branch
          %366 = sbr.rel (%p364) target = $region56
        $region55: #{tpu_custom_call.1} parent=51 // pred_region
          %p367 = scmp.lt.s32.totalorder %s22, 1
          %s368 = scalar_select %p367, %s22, 1
          %s369 = smul.addr %s368, 8
          %s370 = scalar_lea.vmem %s0, %s369
        $region56: #{tpu_custom_call.1} parent=51 // pred_fallthru
          _
        // Predicated region
        $region57: #{tpu_custom_call.1} parent=51 // pred_check
          %p371 = pneg %p68
        $region58: #{tpu_custom_call.1} parent=51 // pred_check_branch
          %373 = sbr.rel (%p371) target = $region60
        $region59: #{tpu_custom_call.1} parent=51 // pred_region
          %p374 = scmp.lt.s32.totalorder %s22, 1
          %s375 = scalar_select %p374, %s22, 1
          %s376 = smul.addr %s375, 2
          %s377 = smul.addr %s376, 4
          %s378 = scalar_lea.vmem %s1, %s377
        $region60: #{tpu_custom_call.1} parent=51 // pred_fallthru
          _
      $region52: #{tpu_custom_call.1} parent=5 // pred_fallthru
        _
      %p379 = scmp.le.s32.totalorder 1, %s22
      %p380 = scmp.lt.s32.totalorder %s22, 3
      %p381 = pnand %p379, %p380
      %p382 = pneg %p381
      // Predicated region
      $region61: #{tpu_custom_call.1} parent=5 // pred_check
        _
      $region62: #{tpu_custom_call.1} parent=5 // pred_check_branch
        %384 = sbr.rel (%p381) target = $region64
      $region63: #{tpu_custom_call.1} parent=5 // pred_region
        %s385 = ssub.s32 %s22, 1
        // Predicated region
        $region65: #{tpu_custom_call.1} parent=63 // pred_check
          %p386 = pneg %p137
        $region66: #{tpu_custom_call.1} parent=63 // pred_check_branch
          %388 = sbr.rel (%p386) target = $region68
        $region67: #{tpu_custom_call.1} parent=63 // pred_region
          %390 = dma.done [#allocation3], 2048
        $region68: #{tpu_custom_call.1} parent=63 // pred_fallthru
          _
        // Predicated region
        $region69: #{tpu_custom_call.1} parent=63 // pred_check
          %p391 = pneg %p158
        $region70: #{tpu_custom_call.1} parent=63 // pred_check_branch
          %393 = sbr.rel (%p391) target = $region72
        $region71: #{tpu_custom_call.1} parent=63 // pred_region
          %395 = dma.done [#allocation6], 128
        $region72: #{tpu_custom_call.1} parent=63 // pred_fallthru
          _
        // Predicated region
        $region73: #{tpu_custom_call.1} parent=63 // pred_check
          %p396 = pneg %p221
        $region74: #{tpu_custom_call.1} parent=63 // pred_check_branch
          %398 = sbr.rel (%p396) target = $region76
        $region75: #{tpu_custom_call.1} parent=63 // pred_region
          %400 = dma.done [#allocation6], 128
        $region76: #{tpu_custom_call.1} parent=63 // pred_fallthru
          _
        %p401 = scmp.lt.s32.totalorder %s27, 1
        %s402 = scalar_select %p401, %s27, 1
        %s403 = smul.addr %s402, 8
        %s404 = scalar_lea.vmem %s0, %s403
        %p405 = pneg %p48
        %p406 = pneg %p45
        %p407 = scmp.lt.s32.totalorder %s27, 1
        %s408 = scalar_select %p407, %s27, 1
        %s409 = smul.addr %s408, 2
        %s410 = smul.addr %s409, 4
        %s411 = scalar_lea.vmem %s1, %s410
        %p412 = pneg %p74
        %p413 = pneg %p71
        %p414 = pneg %p95
        %p415 = pneg %p92
        %p416 = pneg %p116
        %p417 = pneg %p113
        %p418 = pneg %p137
        %p419 = pneg %p134
        %p420 = pneg %p158
        %p421 = pneg %p155
        %p422 = pneg %p179
        %p423 = pneg %p176
        %p424 = pneg %p200
        %p425 = pneg %p197
        %p426 = pneg %p221
        %p427 = pneg %p218
        %p428 = pneg %p242
        %p429 = pneg %p239
        %p430 = pneg %p263
        %p431 = pneg %p260
        %p432 = pneg %p289
        %p433 = pneg %p286
        %s434 = sand.u32 %s276, 1
        %s435 = scalar_lea.sflag [#allocation4], %s434
        %s436 = sand.u32 %s276, 1
        %s437 = smul.addr %s436, 16
        %s438 = scalar_lea.vmem [#allocation8], %s437
        %p439 = scmp.lt.s32.totalorder %s27, 1
        %s440 = scalar_select %p439, %s27, 1
        %s441 = smul.addr %s440, 8
        %s442 = scalar_lea.vmem %s0, %s441
        %p443 = scmp.lt.s32.totalorder %s27, 1
        %s444 = scalar_select %p443, %s27, 1
        %s445 = smul.addr %s444, 2
        %s446 = smul.addr %s445, 4
        %s447 = scalar_lea.vmem %s1, %s446
        %v448 = vld [vmem:[%s2] sm:$0xf]
        %v449 = vld [vmem:[%s442] sm:$0xff]
        %v450 = vld [vmem:[%s3] sm:$0xf]
        %452 = vset.pattern.permute.xlu0 0
        %453 = vperm.xlu0 %452, %v450
        %v454 = vpop.permute.xlu0 %453
        %vm456 = vcmask 64512
        %v458 = vsel %vm456, %v448, 0
        %460 = vmatpush.msra.mxu0 0.0
        %461 = vmatpush.msra.mxu0 0.0
        %462 = vmatpush.msra.mxu0 0.0
        %463 = vmatpush.msra.mxu0 0.0
        %464 = vmatpush.msra.mxu0 0.0
        %465 = vmatpush.msra.mxu0 0.0
        %466 = vmatpush.msra.mxu0 0.0
        %467 = vmatpush.msra.mxu0 0.0
        %468 = vmatpush.msra.mxu0 0.0
        %469 = vmatpush.msra.mxu0 0.0
        %470 = vmatpush.msra.mxu0 0.0
        %471 = vmatpush.msra.mxu0 0.0
        %472 = vmatpush.msra.mxu0 0.0
        %473 = vmatpush.msra.mxu0 0.0
        %474 = vmatpush.msra.mxu0 0.0
        %475 = vmatpush.msra.mxu0 %v449
        %476 = vmatmul.f32.gmra.mxu0 %v458
        %v477 = vpop.f32.mrf.mxu0
        %v478 = vadd.f32 %v454, %v477
        %479 = vdwg.mxu0
        %v480 = vld [vmem:[#allocation2] sm:$0xff]
        %v481 = vld [vmem:[#allocation2 + $0x8] sm:$0xff]
        %v482 = vld [vmem:[#allocation2 + $0x10] sm:$0xff]
        %v483 = vld [vmem:[#allocation2 + $0x18] sm:$0xff]
        %v484 = vld [vmem:[#allocation2 + $0x20] sm:$0xff]
        %v485 = vld [vmem:[#allocation2 + $0x28] sm:$0xff]
        %v486 = vld [vmem:[#allocation2 + $0x30] sm:$0xff]
        %v487 = vld [vmem:[#allocation2 + $0x38] sm:$0xff]
        %v488 = vld [vmem:[#allocation2 + $0x40] sm:$0xff]
        %v489 = vld [vmem:[#allocation2 + $0x48] sm:$0xff]
        %v490 = vld [vmem:[#allocation2 + $0x50] sm:$0xff]
        %v491 = vld [vmem:[#allocation2 + $0x58] sm:$0xff]
        %v492 = vld [vmem:[#allocation2 + $0x60] sm:$0xff]
        %v493 = vld [vmem:[#allocation2 + $0x68] sm:$0xff]
        %v494 = vld [vmem:[#allocation2 + $0x70] sm:$0xff]
        %v495 = vld [vmem:[#allocation2 + $0x78] sm:$0xff]
        %vm496 = vcmask 523264
        %v498 = vsel %vm496, %v478, 0
        %500 = vmatpush.msra.mxu0 0.0
        %501 = vmatpush.msra.mxu0 0.0
        %502 = vmatpush.msra.mxu0 0.0
        %503 = vmatpush.msra.mxu0 0.0
        %504 = vmatpush.msra.mxu0 0.0
        %505 = vmatpush.msra.mxu0 0.0
        %506 = vmatpush.msra.mxu0 0.0
        %507 = vmatpush.msra.mxu0 0.0
        %508 = vmatpush.msra.mxu0 %v494
        %509 = vmatpush.msra.mxu0 %v492
        %510 = vmatpush.msra.mxu0 %v490
        %511 = vmatpush.msra.mxu0 %v488
        %512 = vmatpush.msra.mxu0 %v486
        %513 = vmatpush.msra.mxu0 %v484
        %514 = vmatpush.msra.mxu0 %v482
        %515 = vmatpush.msra.mxu0 %v480
        %516 = vmatmul.f32.gmra.mxu0 %v498
        %v517 = vpop.f32.mrf.mxu0
        %v518 = vadd.f32 0.0, %v517
        %519 = vdwg.mxu0
        %520 = vmatpush.msra.mxu0 0.0
        %521 = vmatpush.msra.mxu0 0.0
        %522 = vmatpush.msra.mxu0 0.0
        %523 = vmatpush.msra.mxu0 0.0
        %524 = vmatpush.msra.mxu0 0.0
        %525 = vmatpush.msra.mxu0 0.0
        %526 = vmatpush.msra.mxu0 0.0
        %527 = vmatpush.msra.mxu0 0.0
        %528 = vmatpush.msra.mxu0 %v495
        %529 = vmatpush.msra.mxu0 %v493
        %530 = vmatpush.msra.mxu0 %v491
        %531 = vmatpush.msra.mxu0 %v489
        %532 = vmatpush.msra.mxu0 %v487
        %533 = vmatpush.msra.mxu0 %v485
        %534 = vmatpush.msra.mxu0 %v483
        %535 = vmatpush.msra.mxu0 %v481
        %536 = vmatmul.f32.gmra.mxu0 %v498
        %v537 = vpop.f32.mrf.mxu0
        %v538 = vadd.f32 0.0, %v537
        %539 = vdwg.mxu0
        %v540 = vld [vmem:[%s447] sm:$0xff]
        %542 = vst [vmem:[#allocation1] ss:$2 sm:$0xff] %v540
        %v543 = vld.sshfl [vmem:[#allocation1] sm:$0xff pattern:$0x75316420]
        %v544 = vld.sshfl [vmem:[#allocation1 + $0x8] sm:$0xff pattern:$0x75316420]
        %v549 = vrot.slane %v518, 4
        %v550 = vrot.slane %v538, 4
        %vm553 = vcmask 1043456
        %v554 = vsel %vm553, %v543, %v549
        %v555 = vsel %vm553, %v544, %v550
        %v556 = vlaneseq
        %v557 = vand.u32 %v556, 127
        %v558 = vadd.s32 %v557, 128
        %vm559 = vcmp.lt.s32.totalorder %v557, 0
        %v560 = vsub.s32 0, %v557
        %v561 = vsel %vm559, %v560, %v557
        %v562 = vshrl.u32 %v561, 4
        %v563 = vand.u32 %v561, 15
        %v564 = vsub.s32 0, %v563
        %v565 = vsel %vm559, %v564, %v563
        %vm566 = vcmp.lt.s32.totalorder %v558, 0
        %v567 = vsub.s32 0, %v558
        %v568 = vsel %vm566, %v567, %v558
        %v569 = vshrl.u32 %v568, 4
        %v570 = vand.u32 %v568, 15
        %v571 = vsub.s32 0, %v570
        %v572 = vsel %vm566, %v571, %v570
        %vm573 = vcmp.ne.s32.totalorder %v565, 0
        %vm574 = vcmp.ne.s32.totalorder %v572, 0
        %vm575 = vcmp.lt.s32.totalorder %v565, 0
        %vm576 = vcmp.lt.s32.totalorder %v572, 0
        %vm577 = vmand %vm575, %vm573
        %vm578 = vmand %vm576, %vm574
        %v579 = vadd.s32 %v565, 16
        %v580 = vadd.s32 %v572, 16
        %v581 = vsel %vm577, %v579, %v565
        %v582 = vsel %vm578, %v580, %v572
        %vm583 = vcmp.ge.s32.totalorder %v581, 1
        %vm584 = vcmp.ge.s32.totalorder %v582, 1
        %v585 = vsel %vm583, 1, 0
        %v586 = vsel %vm584, 1, 0
        %v587 = vcvt.s32.f32 %v585
        %v588 = vcvt.s32.f32 %v586
        %vm589 = vcmp.le.s32.totalorder %v581, 14
        %vm590 = vcmp.le.s32.totalorder %v582, 14
        %v591 = vsel %vm589, 1, 0
        %v592 = vsel %vm590, 1, 0
        %v593 = vcvt.s32.f32 %v591
        %v594 = vcvt.s32.f32 %v592
        %597 = vrot.lane.b32.xlu0 %v554, 17
        %v598 = vpop.permute.xlu0 %597
        %599 = vrot.lane.b32.xlu0 %v555, 17
        %v600 = vpop.permute.xlu0 %599
        %vm601 = vcmask 138240
        %v602 = vsel %vm601, %v598, %v600
        %v605 = vsel %vm601, 0.0, %v598
        %v606 = vmul.f32 %v605, %v587
        %v607 = vmul.f32 %v602, %v588
        %608 = vrot.lane.b32.xlu0 %v554, 16
        %v609 = vpop.permute.xlu0 %608
        %610 = vrot.lane.b32.xlu0 %v555, 16
        %v611 = vpop.permute.xlu0 %610
        %vm612 = vcmask 130048
        %v613 = vsel %vm612, %v609, %v611
        %v616 = vsel %vm612, 0.0, %v609
        %617 = vrot.lane.b32.xlu0 %v554, 15
        %v618 = vpop.permute.xlu0 %617
        %619 = vrot.lane.b32.xlu0 %v555, 15
        %v620 = vpop.permute.xlu0 %619
        %vm621 = vcmask 121856
        %v622 = vsel %vm621, %v618, %v620
        %v625 = vsel %vm621, 0.0, %v618
        %v626 = vmul.f32 %v625, %v593
        %v627 = vmul.f32 %v622, %v594
        %628 = vrot.lane.b32.xlu0 %v554, 1
        %v629 = vpop.permute.xlu0 %628
        %630 = vrot.lane.b32.xlu0 %v555, 1
        %v631 = vpop.permute.xlu0 %630
        %vm632 = vcmask 7168
        %v633 = vsel %vm632, %v629, %v631
        %v636 = vsel %vm632, 0.0, %v629
        %v637 = vmul.f32 %v636, %v587
        %v638 = vmul.f32 %v633, %v588
        %639 = vrot.lane.b32.xlu0 %v554, 127
        %v640 = vpop.permute.xlu0 %639
        %641 = vrot.lane.b32.xlu0 %v555, 127
        %v642 = vpop.permute.xlu0 %641
        %vm643 = vcmask 1039360
        %v644 = vsel %vm643, %v640, %v642
        %v647 = vsel %vm643, %v642, 0.0
        %v648 = vmul.f32 %v644, %v593
        %v649 = vmul.f32 %v647, %v594
        %650 = vrot.lane.b32.xlu0 %v554, 113
        %v651 = vpop.permute.xlu0 %650
        %652 = vrot.lane.b32.xlu0 %v555, 113
        %v653 = vpop.permute.xlu0 %652
        %vm654 = vcmask 924672
        %v655 = vsel %vm654, %v651, %v653
        %v658 = vsel %vm654, %v653, 0.0
        %v659 = vmul.f32 %v655, %v587
        %v660 = vmul.f32 %v658, %v588
        %661 = vrot.lane.b32.xlu0 %v554, 112
        %v662 = vpop.permute.xlu0 %661
        %663 = vrot.lane.b32.xlu0 %v555, 112
        %v664 = vpop.permute.xlu0 %663
        %vm665 = vcmask 916480
        %v666 = vsel %vm665, %v662, %v664
        %v669 = vsel %vm665, %v664, 0.0
        %670 = vrot.lane.b32.xlu0 %v554, 111
        %v671 = vpop.permute.xlu0 %670
        %672 = vrot.lane.b32.xlu0 %v555, 111
        %v673 = vpop.permute.xlu0 %672
        %vm674 = vcmask 908288
        %v675 = vsel %vm674, %v671, %v673
        %v678 = vsel %vm674, %v673, 0.0
        %v679 = vmul.f32 %v675, %v593
        %v680 = vmul.f32 %v678, %v594
        %v681 = vld [vmem:[#allocation5] sm:$0xff]
        %vm682 = vcmask 588800
        %v684 = vsel %vm682, %v681, 0
        %686 = vmatpush.msra.mxu0 0.0
        %687 = vmatpush.msra.mxu0 0.0
        %688 = vmatpush.msra.mxu0 0.0
        %689 = vmatpush.msra.mxu0 0.0
        %690 = vmatpush.msra.mxu0 0.0
        %691 = vmatpush.msra.mxu0 0.0
        %692 = vmatpush.msra.mxu0 0.0
        %693 = vmatpush.msra.mxu0 %v679
        %694 = vmatpush.msra.mxu0 %v666
        %695 = vmatpush.msra.mxu0 %v659
        %696 = vmatpush.msra.mxu0 %v648
        %697 = vmatpush.msra.mxu0 %v554
        %698 = vmatpush.msra.mxu0 %v637
        %699 = vmatpush.msra.mxu0 %v626
        %700 = vmatpush.msra.mxu0 %v616
        %701 = vmatpush.msra.mxu0 %v606
        %702 = vmatmul.f32.gmra.mxu0 %v684
        %v703 = vpop.f32.mrf.mxu0
        %v704 = vadd.f32 0.0, %v703
        %705 = vdwg.mxu0
        %706 = vmatpush.msra.mxu0 0.0
        %707 = vmatpush.msra.mxu0 0.0
        %708 = vmatpush.msra.mxu0 0.0
        %709 = vmatpush.msra.mxu0 0.0
        %710 = vmatpush.msra.mxu0 0.0
        %711 = vmatpush.msra.mxu0 0.0
        %712 = vmatpush.msra.mxu0 0.0
        %713 = vmatpush.msra.mxu0 %v680
        %714 = vmatpush.msra.mxu0 %v669
        %715 = vmatpush.msra.mxu0 %v660
        %716 = vmatpush.msra.mxu0 %v649
        %717 = vmatpush.msra.mxu0 %v555
        %718 = vmatpush.msra.mxu0 %v638
        %719 = vmatpush.msra.mxu0 %v627
        %720 = vmatpush.msra.mxu0 %v613
        %721 = vmatpush.msra.mxu0 %v607
        %722 = vmatmul.f32.gmra.mxu0 %v684
        %v723 = vpop.f32.mrf.mxu0
        %v724 = vadd.f32 0.0, %v723
        %725 = vdwg.mxu0
        %v726 = vld [vmem:[%s6] sm:$0xff]
        %728 = vset.pattern.permute.xlu0 0
        %729 = vperm.xlu0 %728, %v726
        %v730 = vpop.permute.xlu0 %729
        %v732 = vmul.f32 %v704, %v730
        %v733 = vmul.f32 %v724, %v730
        %v734 = vld [vmem:[%s7] sm:$0xff]
        %736 = vset.pattern.permute.xlu0 0
        %737 = vperm.xlu0 %736, %v734
        %v738 = vpop.permute.xlu0 %737
        %v740 = vadd.f32 %v732, %v738
        %v741 = vadd.f32 %v733, %v738
        %vm742 = vcmp.gt.f32.partialorder %v740, 0.0
        %vm743 = vcmp.gt.f32.partialorder %v741, 0.0
        %v744 = vmul.f32 %v740, 0.01
        %v745 = vmul.f32 %v741, 0.01
        %v746 = vsel %vm742, %v740, %v744
        %v747 = vsel %vm743, %v741, %v745
        %750 = vrot.lane.b32.xlu0 %v746, 17
        %v751 = vpop.permute.xlu0 %750
        %752 = vrot.lane.b32.xlu0 %v747, 17
        %v753 = vpop.permute.xlu0 %752
        %v754 = vsel %vm601, %v751, %v753
        %v757 = vsel %vm601, 0.0, %v751
        %v758 = vmul.f32 %v757, %v587
        %v759 = vmul.f32 %v754, %v588
        %760 = vrot.lane.b32.xlu0 %v746, 16
        %v761 = vpop.permute.xlu0 %760
        %762 = vrot.lane.b32.xlu0 %v747, 16
        %v763 = vpop.permute.xlu0 %762
        %v764 = vsel %vm612, %v761, %v763
        %v767 = vsel %vm612, 0.0, %v761
        %768 = vrot.lane.b32.xlu0 %v746, 15
        %v769 = vpop.permute.xlu0 %768
        %770 = vrot.lane.b32.xlu0 %v747, 15
        %v771 = vpop.permute.xlu0 %770
        %v772 = vsel %vm621, %v769, %v771
        %v775 = vsel %vm621, 0.0, %v769
        %v776 = vmul.f32 %v775, %v593
        %v777 = vmul.f32 %v772, %v594
        %778 = vrot.lane.b32.xlu0 %v746, 1
        %v779 = vpop.permute.xlu0 %778
        %780 = vrot.lane.b32.xlu0 %v747, 1
        %v781 = vpop.permute.xlu0 %780
        %v782 = vsel %vm632, %v779, %v781
        %v785 = vsel %vm632, 0.0, %v779
        %v786 = vmul.f32 %v785, %v587
        %v787 = vmul.f32 %v782, %v588
        %788 = vrot.lane.b32.xlu0 %v746, 127
        %v789 = vpop.permute.xlu0 %788
        %790 = vrot.lane.b32.xlu0 %v747, 127
        %v791 = vpop.permute.xlu0 %790
        %v792 = vsel %vm643, %v789, %v791
        %v795 = vsel %vm643, %v791, 0.0
        %v796 = vmul.f32 %v792, %v593
        %v797 = vmul.f32 %v795, %v594
        %798 = vrot.lane.b32.xlu0 %v746, 113
        %v799 = vpop.permute.xlu0 %798
        %800 = vrot.lane.b32.xlu0 %v747, 113
        %v801 = vpop.permute.xlu0 %800
        %v802 = vsel %vm654, %v799, %v801
        %v805 = vsel %vm654, %v801, 0.0
        %v806 = vmul.f32 %v802, %v587
        %v807 = vmul.f32 %v805, %v588
        %808 = vrot.lane.b32.xlu0 %v746, 112
        %v809 = vpop.permute.xlu0 %808
        %810 = vrot.lane.b32.xlu0 %v747, 112
        %v811 = vpop.permute.xlu0 %810
        %v812 = vsel %vm665, %v809, %v811
        %v815 = vsel %vm665, %v811, 0.0
        %816 = vrot.lane.b32.xlu0 %v746, 111
        %v817 = vpop.permute.xlu0 %816
        %818 = vrot.lane.b32.xlu0 %v747, 111
        %v819 = vpop.permute.xlu0 %818
        %v820 = vsel %vm674, %v817, %v819
        %v823 = vsel %vm674, %v819, 0.0
        %v824 = vmul.f32 %v820, %v593
        %v825 = vmul.f32 %v823, %v594
        %v826 = vld [vmem:[#allocation7] sm:$0xff]
        %v828 = vsel %vm682, %v826, 0
        %830 = vmatpush.msra.mxu0 0.0
        %831 = vmatpush.msra.mxu0 0.0
        %832 = vmatpush.msra.mxu0 0.0
        %833 = vmatpush.msra.mxu0 0.0
        %834 = vmatpush.msra.mxu0 0.0
        %835 = vmatpush.msra.mxu0 0.0
        %836 = vmatpush.msra.mxu0 0.0
        %837 = vmatpush.msra.mxu0 %v824
        %838 = vmatpush.msra.mxu0 %v812
        %839 = vmatpush.msra.mxu0 %v806
        %840 = vmatpush.msra.mxu0 %v796
        %841 = vmatpush.msra.mxu0 %v746
        %842 = vmatpush.msra.mxu0 %v786
        %843 = vmatpush.msra.mxu0 %v776
        %844 = vmatpush.msra.mxu0 %v767
        %845 = vmatpush.msra.mxu0 %v758
        %846 = vmatmul.f32.gmra.mxu0 %v828
        %v847 = vpop.f32.mrf.mxu0
        %v848 = vadd.f32 0.0, %v847
        %849 = vdwg.mxu0
        %850 = vmatpush.msra.mxu0 0.0
        %851 = vmatpush.msra.mxu0 0.0
        %852 = vmatpush.msra.mxu0 0.0
        %853 = vmatpush.msra.mxu0 0.0
        %854 = vmatpush.msra.mxu0 0.0
        %855 = vmatpush.msra.mxu0 0.0
        %856 = vmatpush.msra.mxu0 0.0
        %857 = vmatpush.msra.mxu0 %v825
        %858 = vmatpush.msra.mxu0 %v815
        %859 = vmatpush.msra.mxu0 %v807
        %860 = vmatpush.msra.mxu0 %v797
        %861 = vmatpush.msra.mxu0 %v747
        %862 = vmatpush.msra.mxu0 %v787
        %863 = vmatpush.msra.mxu0 %v777
        %864 = vmatpush.msra.mxu0 %v764
        %865 = vmatpush.msra.mxu0 %v759
        %866 = vmatmul.f32.gmra.mxu0 %v828
        %v867 = vpop.f32.mrf.mxu0
        %v868 = vadd.f32 0.0, %v867
        %869 = vdwg.mxu0
        %v870 = vld [vmem:[%s9] sm:$0xff]
        %872 = vset.pattern.permute.xlu0 0
        %873 = vperm.xlu0 %872, %v870
        %v874 = vpop.permute.xlu0 %873
        %v876 = vmul.f32 %v848, %v874
        %v877 = vmul.f32 %v868, %v874
        %v878 = vld [vmem:[%s10] sm:$0xff]
        %880 = vset.pattern.permute.xlu0 0
        %881 = vperm.xlu0 %880, %v878
        %v882 = vpop.permute.xlu0 %881
        %v884 = vadd.f32 %v876, %v882
        %v885 = vadd.f32 %v877, %v882
        %vm886 = vcmp.gt.f32.partialorder %v884, 0.0
        %vm887 = vcmp.gt.f32.partialorder %v885, 0.0
        %v888 = vmul.f32 %v884, 0.01
        %v889 = vmul.f32 %v885, 0.01
        %v890 = vsel %vm886, %v884, %v888
        %v891 = vsel %vm887, %v885, %v889
        %892 = vst [vmem:[%s438] sm:$0xff] %v890
        %893 = vst [vmem:[%s438 + $0x8] sm:$0xff] %v891
        %s894 = sand.u32 %s276, 1
        %s895 = scalar_lea.sflag [#allocation4], %s894
        %s896 = sand.u32 %s276, 1
        %s897 = smul.addr %s896, 16
        %s898 = scalar_lea.vmem [#allocation8], %s897
        // Predicated region
        $region77: #{tpu_custom_call.1} parent=63 // pred_check
          %p899 = pneg %p286
        $region78: #{tpu_custom_call.1} parent=63 // pred_check_branch
          %901 = sbr.rel (%p899) target = $region80
        $region79: #{tpu_custom_call.1} parent=63 // pred_region
          %903 = vsyncadd %s895, 0
          %s904 = smul.addr %s27, 2
          %s905 = smul.addr %s904, 8
          %s906 = scalar_lea.hbm %s11, %s905
          %s908 = sshll.u32 %s898, 4
          %s909 = int_to_ptr.vmem [resolvable:$true] %s908
          %s910 = sshll.u32 %s906, 4
          %s911 = int_to_ptr.hbm [resolvable:$true] %s910
          %913 = dma.vmem_to_hbm [thread:$0]  %s909, 256, %s911, %s895
        $region80: #{tpu_custom_call.1} parent=63 // pred_fallthru
          _
      $region64: #{tpu_custom_call.1} parent=5 // pred_fallthru
        _
      %p914 = scmp.le.s32.totalorder 2, %s22
      // Predicated region
      $region81: #{tpu_custom_call.1} parent=5 // pred_check
        %p915 = pneg %p914
      $region82: #{tpu_custom_call.1} parent=5 // pred_check_branch
        %917 = sbr.rel (%p915) target = $region84
      $region83: #{tpu_custom_call.1} parent=5 // pred_region
        %s918 = ssub.s32 %s22, 2
        // Predicated region
        $region85: #{tpu_custom_call.1} parent=83 // pred_check
          %p919 = pneg %p292
        $region86: #{tpu_custom_call.1} parent=83 // pred_check_branch
          %921 = sbr.rel (%p919) target = $region88
        $region87: #{tpu_custom_call.1} parent=83 // pred_region
          %s922 = sand.u32 %s277, 1
          %s923 = scalar_lea.sflag [#allocation4], %s922
          %s924 = sand.u32 %s277, 1
          %s925 = smul.addr %s924, 16
          %s926 = scalar_lea.vmem [#allocation8], %s925
          %928 = dma.done %s923, 256
        $region88: #{tpu_custom_call.1} parent=83 // pred_fallthru
          _
      $region84: #{tpu_custom_call.1} parent=5 // pred_fallthru
        _
    $region6: #{tpu_custom_call.1} parent=1 // loop_footer
      %s26 = sadd.s32 1, %s22
    $region7: #{tpu_custom_call.1} parent=1 // loop_footer_branch
      %21 = sbr.rel target = $region3
    $region8: #{tpu_custom_call.1} parent=1 // loop_exit
      _
    %929 = vsyncpa [#allocation3], 1
    %s930 = scalar_lea.sflag [#allocation3], 1
    %931 = vsyncpa %s930, 1
    %932 = vsyncpa [#allocation6], 1
    %933 = vsyncpa [#allocation4], 1
    %s934 = scalar_lea.sflag [#allocation4], 1
    %935 = vsyncpa %s934, 1

</llo_original>
